<compile_context>
chip_gen: v6e
topology: v6e:2x2x1
jax: 0.10.0
libtpu: 0.0.40
codegen_flags: <defaults>
</compile_context>

<pallas_src>
import functools

import jax
import jax.numpy as jnp
import numpy as np
from jax.experimental import pallas as pl
from jax.experimental.pallas import tpu as pltpu


def _pe_add_kernel(x_ref, pe_ref, o_ref):
    # Eval path: out = x + pe (pe block is (1, TN) and broadcasts over rows).
    # Math stays in the input dtype (no f32 upcast) — bf16 VALU is fine on v6e/v7x.
    o_ref[...] = x_ref[...] + pe_ref[...]


def _pe_add_dropout_kernel(x_ref, pe_ref, keep_ref, o_ref, *, scale):
    # Training path: inverted dropout.  keep_ref holds 0/1 in the compute dtype.
    o_ref[...] = (x_ref[...] + pe_ref[...]) * (keep_ref[...] * scale)


def _pick_tile(dim, align, max_elems):
    """Largest tile that divides `dim`, is a multiple of `align` (when possible)
    and has at most `max_elems` elements.  Falls back to the full dim when the
    dim is not align-divisible (full-extent blocks satisfy the (8,128) rule)."""
    if dim % align != 0 or dim <= max_elems:
        return dim
    best = align
    cand = align
    while cand <= max_elems:
        if dim % cand == 0:
            best = cand
        cand += align
    return best


def learned_positional_encoding(x, pe, *, drop_prob=0.1, training=True, seed=0):
    """Pallas equivalent of LearnedPositionalEncoding.forward.

    x:  (B, S, D)
    pe: (1, S_max, D) with S <= S_max  (sliced like pe[:, :x.size(1)])
    """
    B, S, D = x.shape
    N = S * D
    dtype = x.dtype

    # Tiny slice of the parameter table (1*S*D elems), then flatten to a
    # lane-dense 2-D view; the elementwise add/dropout is reshape-invariant.
    pe_flat = pe[:, :S, :].astype(dtype).reshape(1, N)
    x_flat = x.reshape(B, N)

    # Tile sizes: keep each block around <=2 MiB so the double-buffered
    # pipeline (x, pe, mask, out) fits comfortably in VMEM even on v7x (64 MiB).
    itemsize = jnp.dtype(dtype).itemsize
    budget_elems = max(128, (1 << 21) // itemsize)      # ~2 MiB per block
    tn = _pick_tile(N, 128, budget_elems)               # lane-dense column tile
    if B % 8 == 0:
        tb = _pick_tile(B, 8, max(8, budget_elems // tn))
    else:
        tb = B                                          # full batch per block
    n_col = N // tn
    n_row = B // tb

    # Grid: (column tiles, row tiles) with the row/batch axis innermost so the
    # pe block index stays constant across consecutive steps (DMA reuse).
    grid = (n_col, n_row)
    x_spec = pl.BlockSpec((tb, tn), lambda j, i: (i, j))
    pe_spec = pl.BlockSpec((1, tn), lambda j, i: (0, j))
    out_spec = pl.BlockSpec((tb, tn), lambda j, i: (i, j))

    apply_dropout = bool(training) and float(drop_prob) > 0.0
    if apply_dropout:
        keep = jax.random.bernoulli(
            jax.random.PRNGKey(seed), p=1.0 - float(drop_prob), shape=(B, N)
        ).astype(dtype)
        kernel = functools.partial(
            _pe_add_dropout_kernel, scale=float(1.0 / (1.0 - float(drop_prob)))
        )
        in_specs = [x_spec, pe_spec, pl.BlockSpec((tb, tn), lambda j, i: (i, j))]
        args = (x_flat, pe_flat, keep)
    else:
        kernel = _pe_add_kernel
        in_specs = [x_spec, pe_spec]
        args = (x_flat, pe_flat)

    out_flat = pl.pallas_call(
        kernel,
        out_shape=jax.ShapeDtypeStruct((B, N), dtype),
        grid=grid,
        in_specs=in_specs,
        out_specs=out_spec,
        compiler_params=pltpu.CompilerParams(
            dimension_semantics=("parallel", "parallel"),
        ),
    )(*args)

    return out_flat.reshape(B, S, D)


if __name__ == "__main__":
    # Module hyperparameters (shapes implied by __init__ / forward).
    seq_len = 8      # max sequence length for the learned PE table
    d_model = 32
    batch = 2
    drop_prob = 0.1

    key = jax.random.PRNGKey(0)
    k_x, k_pe = jax.random.split(key)

    # Deterministic "parameter" init (stand-in for torch.randn(1, seq_len, d_model)).
    pe = jax.random.normal(k_pe, (1, seq_len, d_model), dtype=jnp.float32)
    # Input uses the full sequence length here (x.size(1) == seq_len).
    x = jax.random.normal(k_x, (batch, seq_len, d_model), dtype=jnp.float32)

    # Eval mode (dropout is identity) — verify against pure-JAX reference.
    out_eval = learned_positional_encoding(
        x, pe, drop_prob=drop_prob, training=False
    )
    jax.block_until_ready(out_eval)
    ref = x + pe[:, : x.shape[1]]
    np.testing.assert_allclose(
        np.asarray(out_eval), np.asarray(ref), rtol=1e-6, atol=1e-6
    )

    # Training mode (inverted dropout applied inside the kernel).
    out_train = learned_positional_encoding(
        x, pe, drop_prob=drop_prob, training=True, seed=1234
    )
    jax.block_until_ready(out_train)
    ot = np.asarray(out_train)
    oe = np.asarray(out_eval)
    kept = ot != 0.0
    np.testing.assert_allclose(
        ot[kept], oe[kept] / (1.0 - drop_prob), rtol=1e-5, atol=1e-5
    )

    print("KERNEL_OK")
</pallas_src>

<mosaic_0001>
module attributes {stable_mosaic.version = 11 : i64} {
  func.func @_pe_add_kernel(%arg0: i32, %arg1: i32, %arg2: memref<2x256xf32, #tpu.memory_space<vmem>>, %arg3: memref<1x256xf32, #tpu.memory_space<vmem>>, %arg4: memref<2x256xf32, #tpu.memory_space<vmem>>) attributes {dimension_semantics = [#tpu.dimension_semantics<parallel>, #tpu.dimension_semantics<parallel>], iteration_bounds = array<i64: 1, 1>, scalar_prefetch = 0 : i64, scratch_operands = 0 : i64, tpu.core_type = #tpu.core_type<tc>, window_params = [{transform_indices = @transform_0, window_bounds = array<i64: 2, 256>}, {transform_indices = @transform_1, window_bounds = array<i64: 1, 256>}, {transform_indices = @transform_2, window_bounds = array<i64: 2, 256>}]} {
    %c0 = arith.constant 0 : index
    %c0_0 = arith.constant 0 : index
    %0 = vector.load %arg2[%c0, %c0_0] : memref<2x256xf32, #tpu.memory_space<vmem>>, vector<2x256xf32>
    %c0_1 = arith.constant 0 : index
    %c0_2 = arith.constant 0 : index
    %1 = vector.load %arg3[%c0_1, %c0_2] : memref<1x256xf32, #tpu.memory_space<vmem>>, vector<1x256xf32>
    %2 = vector.broadcast %1 : vector<1x256xf32> to vector<2x256xf32>
    %3 = arith.addf %0, %2 : vector<2x256xf32>
    %c0_3 = arith.constant 0 : index
    %c0_4 = arith.constant 0 : index
    %4 = vector.load %arg4[%c0_3, %c0_4] : memref<2x256xf32, #tpu.memory_space<vmem>>, vector<2x256xf32>
    tpu.vector_store %arg4[%c0_3, %c0_4], %3 {strides = array<i32>} : memref<2x256xf32, #tpu.memory_space<vmem>>, vector<2x256xf32>,
    return
  }
  func.func @transform_0(%arg0: i32, %arg1: i32) -> (i32, i32) {
    %c0_i32 = arith.constant 0 : i32
    return %arg1, %arg0 : i32, i32
  }
  func.func @transform_1(%arg0: i32, %arg1: i32) -> (i32, i32) {
    %c0_i32 = arith.constant 0 : i32
    %c0_i32_0 = arith.constant 0 : i32
    return %c0_i32, %arg0 : i32, i32
  }
  func.func @transform_2(%arg0: i32, %arg1: i32) -> (i32, i32) {
    %c0_i32 = arith.constant 0 : i32
    return %arg1, %arg0 : i32, i32
  }
}

</mosaic_0001>

<llo_original>
// kernel: tpu_custom_call.1
$region0: #{tpu_custom_call.1}
  #allocation0 [shape = 'u32[]', space=smem, size = 0x4, offset = 0x4, fixed_abs, tag = 'smem constant byte address 0x4 - core index']
  #allocation1 [shape = 'u32[144,128]{1,0:T(1,128)}', space=vmem, size = 0x12000, scoped, tag = 'internal scratch']
  %s0 = inlined_call_operand.hbm [shape: f32[2,256], index: 0, kind: input, shape index: {}]
  %s1 = inlined_call_operand.hbm [shape: f32[1,256], index: 1, kind: input, shape index: {}]
  %s2 = inlined_call_operand.hbm [shape: f32[2,256], index: 2, kind: output, shape index: {}]
  %s3 = sld [smem:[#allocation0]]
  $region26: #{tpu_custom_call.1} parent=0
    _
  %s5 = ssub.s32 1, %s3
  %s6 = scalar_select 0, %s5, %s3
  $region1: #{tpu_custom_call.1} parent=0
    #allocation2 [shape = 'u8[2048]{0}', space=vmem, size = 0x800, scoped, tag = 'input window, operand 0, single buffered']
    #allocation3 [shape = 's32[1]{0}', space=sflag, size = 0x4, scoped, tag = 'scoped memory for tpu_custom_call.1']
    #allocation4 [shape = 's32[1]{0}', space=sflag, size = 0x4, scoped, tag = 'scoped memory for tpu_custom_call.1']
    #allocation5 [shape = 'u8[1024]{0}', space=vmem, size = 0x400, scoped, tag = 'input window, operand 1, single buffered']
    #allocation6 [shape = 's32[1]{0}', space=sflag, size = 0x4, scoped, tag = 'scoped memory for tpu_custom_call.1']
    #allocation7 [shape = 'u8[2048]{0}', space=vmem, size = 0x800, scoped, tag = 'output window, operand 0, single buffered']
    %7 = vsyncpa [#allocation3], 0
    %8 = vsyncpa [#allocation6], 0
    %9 = vsyncpa [#allocation4], 0
    // Predicated region
    $region2: #{tpu_custom_call.1} parent=1 // pred_check
      _
    $region3: #{tpu_custom_call.1} parent=1 // pred_check_branch
      %11 = sbr.rel (0) target = $region5
    $region4: #{tpu_custom_call.1} parent=1 // pred_region
      %s13 = ssub.s32 64, 64
      %14 = vsyncadd [#allocation3], %s13
      %s16 = sshll.u32 [#allocation2], 4
      %s17 = int_to_ptr.vmem [resolvable:$true] %s16
      %19 = dma.hbm_to_vmem [thread:$0]  %s0, 64, %s17, [#allocation3]
    $region5: #{tpu_custom_call.1} parent=1 // pred_fallthru
      _
    // Predicated region
    $region6: #{tpu_custom_call.1} parent=1 // pred_check
      _
    $region7: #{tpu_custom_call.1} parent=1 // pred_check_branch
      %21 = sbr.rel (0) target = $region9
    $region8: #{tpu_custom_call.1} parent=1 // pred_region
      %s23 = ssub.s32 32, 32
      %24 = vsyncadd [#allocation6], %s23
      %s26 = sshll.u32 [#allocation5], 4
      %s27 = int_to_ptr.vmem [resolvable:$true] %s26
      %29 = dma.hbm_to_vmem [thread:$0]  %s1, 32, %s27, [#allocation6]
    $region9: #{tpu_custom_call.1} parent=1 // pred_fallthru
      _
    // Predicated region
    $region10: #{tpu_custom_call.1} parent=1 // pred_check
      _
    $region11: #{tpu_custom_call.1} parent=1 // pred_check_branch
      %31 = sbr.rel (0) target = $region13
    $region12: #{tpu_custom_call.1} parent=1 // pred_region
      %32 = dma.done [#allocation3], 64
    $region13: #{tpu_custom_call.1} parent=1 // pred_fallthru
      _
    // Predicated region
    $region14: #{tpu_custom_call.1} parent=1 // pred_check
      _
    $region15: #{tpu_custom_call.1} parent=1 // pred_check_branch
      %34 = sbr.rel (0) target = $region17
    $region16: #{tpu_custom_call.1} parent=1 // pred_region
      %35 = dma.done [#allocation6], 32
    $region17: #{tpu_custom_call.1} parent=1 // pred_fallthru
      _
    %v36 = vld [vmem:[#allocation2] sm:$0xf]
    %v37 = vld [vmem:[#allocation5] sm:$0x3]
    %v39 = vlaneseq
    %v40 = vshrl.u32 %v39, 7
    %v41 = vsub.s32 0, %v40
    %v42 = vrot.slane %v37, %v41
    %v43 = vlaneseq
    %v44 = vshrl.u32 %v43, 7
    %v45 = vsub.s32 1, %v44
    %v46 = vrot.slane %v37, %v45
    %v47 = vcombine.low %v42, %v46
    %v49 = vunpack.c.l.s4 1983009808
    %v50 = vunpack.c.0.s8 %v49
    %v51 = vlaneseq
    %v52 = vshrl.u32 %v51, 7
    %v53 = vsub.s32 %v50, %v52
    %v54 = vrot.slane %v47, %v53
    %v56 = vadd.f32 %v36, %v54
    %57 = vst [vmem:[#allocation7] sm:$0xf] %v56
    // Predicated region
    $region18: #{tpu_custom_call.1} parent=1 // pred_check
      _
    $region19: #{tpu_custom_call.1} parent=1 // pred_check_branch
      %59 = sbr.rel (0) target = $region21
    $region20: #{tpu_custom_call.1} parent=1 // pred_region
      %s61 = ssub.s32 64, 64
      %62 = vsyncadd [#allocation4], %s61
      %s64 = sshll.u32 [#allocation7], 4
      %s65 = int_to_ptr.vmem [resolvable:$true] %s64
      %67 = dma.vmem_to_hbm [thread:$0]  %s65, 64, %s2, [#allocation4]
    $region21: #{tpu_custom_call.1} parent=1 // pred_fallthru
      _
    // Predicated region
    $region22: #{tpu_custom_call.1} parent=1 // pred_check
      _
    $region23: #{tpu_custom_call.1} parent=1 // pred_check_branch
      %69 = sbr.rel (0) target = $region25
    $region24: #{tpu_custom_call.1} parent=1 // pred_region
      %70 = dma.done [#allocation4], 64
    $region25: #{tpu_custom_call.1} parent=1 // pred_fallthru
      _
    %71 = vsyncpa [#allocation3], 1
    %72 = vsyncpa [#allocation6], 1
    %73 = vsyncpa [#allocation4], 1

</llo_original>
